<compile_context>
chip_gen: v6e
topology: v6e:2x2x1
jax: 0.10.0
libtpu: 0.0.40
codegen_flags: <defaults>
</compile_context>

<pallas_src>
import functools

import jax
import jax.numpy as jnp
from jax.experimental import pallas as pl
from jax.experimental.pallas import tpu as pltpu


def _round_up(x, m):
    return ((x + m - 1) // m) * m


def _gelu_tanh(x):
    # GELU, tanh approximation (matches nn.GELU(approximate='tanh')).
    # Constants are weakly typed so the math stays in x's dtype.
    c = 0.7978845608028654  # sqrt(2/pi)
    return 0.5 * x * (1.0 + jnp.tanh(c * (x + 0.044715 * x * x * x)))


def _physical_vmem_bytes():
    try:
        return int(pltpu.get_tpu_info().vmem_capacity_bytes)
    except Exception:
        return 128 * 1024 * 1024  # v5e / v6e default


def _gelu_dtype(x_dtype):
    # bf16 VPU/EUP exist on v6e/v7x but not v5e: keep GELU math in f32 there.
    if jnp.dtype(x_dtype) != jnp.dtype(jnp.bfloat16):
        return jnp.float32
    try:
        kind = jax.devices()[0].device_kind.lower()
    except Exception:
        kind = ""
    return jnp.float32 if "v5" in kind else jnp.bfloat16


def _resident_kernel(x_ref, w1_ref, b1_ref, w2_ref, b2_ref, o_ref, *, gelu_dtype):
    # Full hidden dim resident: fc1 -> GELU -> fc2 in one pass per M tile.
    h = jnp.dot(x_ref[...], w1_ref[...], preferred_element_type=jnp.float32)
    h = h.astype(gelu_dtype) + b1_ref[...].astype(gelu_dtype)
    h = _gelu_tanh(h)
    y = jnp.dot(h.astype(w2_ref.dtype), w2_ref[...],
                preferred_element_type=jnp.float32)
    y = y + b2_ref[...].astype(jnp.float32)
    o_ref[...] = y.astype(o_ref.dtype)


def _chunked_kernel(x_ref, w1_ref, b1_ref, w2_ref, b2_ref, o_ref, acc_ref, *,
                    gelu_dtype):
    # x_ref:  (bm, D)   w1_ref: (D, bh)   b1_ref: (1, bh)
    # w2_ref: (bh, D)   b2_ref: (1, D)    acc_ref: (bm, D) f32, resident over hk
    hk = pl.program_id(1)

    @pl.when(hk == 0)
    def _():
        # Fold b2 into the accumulator init (saves a (bm, D) add in epilogue).
        acc_ref[...] = jnp.broadcast_to(
            b2_ref[...].astype(jnp.float32), acc_ref.shape)

    h = jnp.dot(x_ref[...], w1_ref[...], preferred_element_type=jnp.float32)
    h = h.astype(gelu_dtype) + b1_ref[...].astype(gelu_dtype)
    h = _gelu_tanh(h)
    acc_ref[...] += jnp.dot(h.astype(w2_ref.dtype), w2_ref[...],
                            preferred_element_type=jnp.float32)

    @pl.when(hk == pl.num_programs(1) - 1)
    def _():
        o_ref[...] = acc_ref[...].astype(o_ref.dtype)


@functools.partial(jax.jit, static_argnames=("block_m", "block_h"))
def mlp_forward(x, w1, b1, w2, b2, *, block_m=512, block_h=None):
    """x: (B, T, D) -> (B, T, D).  w1: (D, 4D), b1: (4D,), w2: (4D, D), b2: (D,)."""
    B, T, D = x.shape
    H = w1.shape[1]
    M = B * T
    assert D % 128 == 0, "emb dim must be a multiple of 128 (lane-dense output)"
    # (D a multiple of 256 fully feeds the 256-wide MXU on v6e/v7x.)

    x_item = jnp.dtype(x.dtype).itemsize
    w_item = jnp.dtype(w1.dtype).itemsize
    out_item = x_item
    gelu_dtype = _gelu_dtype(x.dtype)

    # Generation-aware VMEM budget (64 MiB physical/TC on v7x, 128 MiB v5e/v6e).
    phys = _physical_vmem_bytes()
    vmem_limit = min(int(phys * 0.8), 100 * 1024 * 1024)
    budget = int(vmem_limit * 0.85)

    # Avoid padding tiny batches up to huge M tiles.
    block_m = min(block_m, _round_up(M, 16))
    M_pad = _round_up(M, block_m)

    def resident_bytes(bm):
        w_bytes = 2 * (w1.size + w2.size + b1.size + b2.size) * w_item
        io_bytes = 2 * bm * D * (x_item + out_item)
        h_bytes = bm * H * 4  # f32 intermediate / spill headroom
        return w_bytes + io_bytes + h_bytes

    def chunked_bytes(bm, bh):
        w_bytes = 2 * (D * bh + bh * D + bh + D) * w_item
        io_bytes = 2 * bm * D * (x_item + out_item)
        acc_bytes = bm * D * 4
        h_bytes = bm * bh * 4
        return w_bytes + io_bytes + acc_bytes + h_bytes

    if block_h is None:
        # Keep full weights resident in VMEM when they fit: DMA'd once instead
        # of re-streamed per M tile.
        block_h = H if resident_bytes(block_m) <= budget else min(H, 512)
    assert H % block_h == 0, "hidden dim must be divisible by block_h"

    if block_h < H:
        # Shrink tiles until the chunked working set fits the VMEM budget.
        while (chunked_bytes(block_m, block_h) > budget and block_h > 256
               and H % (block_h // 2) == 0):
            block_h //= 2
        while chunked_bytes(block_m, block_h) > budget and block_m > 128:
            block_m //= 2
        M_pad = _round_up(M, block_m)

    x2 = x.reshape(M, D)
    if M_pad != M:
        x2 = jnp.pad(x2, ((0, M_pad - M), (0, 0)))
    b1_2 = b1.reshape(1, H)
    b2_2 = b2.reshape(1, D)

    num_m_tiles = M_pad // block_m
    weight_bytes = (w1.size + w2.size + b1.size + b2.size) * w_item
    weight_reads = weight_bytes if block_h == H else num_m_tiles * weight_bytes
    cost = pl.CostEstimate(
        flops=4 * M_pad * D * H,          # two matmuls
        transcendentals=M_pad * H,        # tanh in GELU
        bytes_accessed=x2.size * x_item + weight_reads + M_pad * D * out_item,
    )

    if block_h == H:
        grid_spec = pltpu.PrefetchScalarGridSpec(
            num_scalar_prefetch=0,
            grid=(num_m_tiles,),
            in_specs=[
                pl.BlockSpec((block_m, D), lambda i: (i, 0)),   # x rows
                pl.BlockSpec((D, H), lambda i: (0, 0)),         # W1 (resident)
                pl.BlockSpec((1, H), lambda i: (0, 0)),         # b1
                pl.BlockSpec((H, D), lambda i: (0, 0)),         # W2 (resident)
                pl.BlockSpec((1, D), lambda i: (0, 0)),         # b2
            ],
            out_specs=pl.BlockSpec((block_m, D), lambda i: (i, 0)),
        )
        kernel = functools.partial(_resident_kernel, gelu_dtype=gelu_dtype)
        dims = ("parallel",)
    else:
        grid_spec = pltpu.PrefetchScalarGridSpec(
            num_scalar_prefetch=0,
            grid=(num_m_tiles, H // block_h),
            in_specs=[
                pl.BlockSpec((block_m, D), lambda i, k: (i, 0)),   # x rows
                pl.BlockSpec((D, block_h), lambda i, k: (0, k)),   # W1 H-chunk
                pl.BlockSpec((1, block_h), lambda i, k: (0, k)),   # b1 H-chunk
                pl.BlockSpec((block_h, D), lambda i, k: (k, 0)),   # W2 H-chunk
                pl.BlockSpec((1, D), lambda i, k: (0, 0)),         # b2
            ],
            out_specs=pl.BlockSpec((block_m, D), lambda i, k: (i, 0)),
            scratch_shapes=[pltpu.VMEM((block_m, D), jnp.float32)],
        )
        kernel = functools.partial(_chunked_kernel, gelu_dtype=gelu_dtype)
        dims = ("parallel", "arbitrary")

    out2 = pl.pallas_call(
        kernel,
        out_shape=jax.ShapeDtypeStruct((M_pad, D), x.dtype),
        grid_spec=grid_spec,
        compiler_params=pltpu.CompilerParams(
            dimension_semantics=dims,
            vmem_limit_bytes=vmem_limit,
        ),
        cost_estimate=cost,
    )(x2, w1, b1_2, w2, b2_2)

    return out2[:M].reshape(B, T, D)


def reference_mlp(x, w1, b1, w2, b2):
    h = jnp.dot(x, w1) + b1
    h = _gelu_tanh(h)
    return jnp.dot(h, w2) + b2


if __name__ == "__main__":
    # Small GPT2Config-like shapes: batch=2, seq=8, emb_dim=128 -> hidden=512.
    B, T, D = 2, 8, 128
    H = 4 * D

    key = jax.random.PRNGKey(0)
    kx, k1, k2, k3, k4 = jax.random.split(key, 5)

    x = jax.random.normal(kx, (B, T, D), dtype=jnp.float32)
    w1 = jax.random.normal(k1, (D, H), dtype=jnp.float32) * (1.0 / jnp.sqrt(D))
    b1 = jax.random.normal(k2, (H,), dtype=jnp.float32) * 0.01
    w2 = jax.random.normal(k3, (H, D), dtype=jnp.float32) * (1.0 / jnp.sqrt(H))
    b2 = jax.random.normal(k4, (D,), dtype=jnp.float32) * 0.01

    ref = reference_mlp(x, w1, b1, w2, b2)

    # Path 1: resident-weights fast path (default; weights easily fit VMEM).
    out_res = jax.block_until_ready(mlp_forward(x, w1, b1, w2, b2))
    assert out_res.shape == (B, T, D)
    assert jnp.allclose(out_res, ref, atol=2e-3, rtol=2e-3), "resident mismatch"

    # Path 2: H-chunked accumulation path (exercised explicitly for coverage).
    out_chk = jax.block_until_ready(
        mlp_forward(x, w1, b1, w2, b2, block_m=256, block_h=256))
    assert jnp.allclose(out_chk, ref, atol=2e-3, rtol=2e-3), "chunked mismatch"

    print("KERNEL_OK")
</pallas_src>

<mosaic_0001>
module attributes {stable_mosaic.version = 11 : i64} {
  func.func @_resident_kernel(%arg0: i32, %arg1: memref<16x128xf32, #tpu.memory_space<vmem>>, %arg2: memref<128x512xf32, #tpu.memory_space<vmem>>, %arg3: memref<1x512xf32, #tpu.memory_space<vmem>>, %arg4: memref<512x128xf32, #tpu.memory_space<vmem>>, %arg5: memref<1x128xf32, #tpu.memory_space<vmem>>, %arg6: memref<16x128xf32, #tpu.memory_space<vmem>>) attributes {dimension_semantics = [#tpu.dimension_semantics<parallel>], iteration_bounds = array<i64: 1>, scalar_prefetch = 0 : i64, scratch_operands = 0 : i64, tpu.core_type = #tpu.core_type<tc>, window_params = [{transform_indices = @transform_0, window_bounds = array<i64: 16, 128>}, {pipeline_mode = #tpu.pipeline_mode<synchronous>, transform_indices = @transform_1, window_bounds = array<i64: 128, 512>}, {pipeline_mode = #tpu.pipeline_mode<synchronous>, transform_indices = @transform_2, window_bounds = array<i64: 1, 512>}, {pipeline_mode = #tpu.pipeline_mode<synchronous>, transform_indices = @transform_3, window_bounds = array<i64: 512, 128>}, {pipeline_mode = #tpu.pipeline_mode<synchronous>, transform_indices = @transform_4, window_bounds = array<i64: 1, 128>}, {transform_indices = @transform_5, window_bounds = array<i64: 16, 128>}]} {
    %c0 = arith.constant 0 : index
    %c0_0 = arith.constant 0 : index
    %0 = vector.load %arg1[%c0, %c0_0] : memref<16x128xf32, #tpu.memory_space<vmem>>, vector<16x128xf32>
    %c0_1 = arith.constant 0 : index
    %c0_2 = arith.constant 0 : index
    %1 = vector.load %arg2[%c0_1, %c0_2] : memref<128x512xf32, #tpu.memory_space<vmem>>, vector<128x512xf32>
    %cst = arith.constant dense<0.000000e+00> : vector<16x512xf32>
    %2 = tpu.matmul %0, %1, %cst {dimension_numbers = #tpu.dot_dimension_numbers<[1], [0], [0], [1], [0, 0, 1, 1], [], []>} : vector<16x128xf32>, vector<128x512xf32>, vector<16x512xf32> -> vector<16x512xf32>
    %c0_3 = arith.constant 0 : index
    %c0_4 = arith.constant 0 : index
    %3 = vector.load %arg3[%c0_3, %c0_4] : memref<1x512xf32, #tpu.memory_space<vmem>>, vector<1x512xf32>
    %4 = vector.broadcast %3 : vector<1x512xf32> to vector<16x512xf32>
    %5 = arith.addf %2, %4 : vector<16x512xf32>
    %cst_5 = arith.constant 5.000000e-01 : f32
    %6 = vector.broadcast %cst_5 : f32 to vector<16x512xf32>
    %7 = arith.mulf %6, %5 : vector<16x512xf32>
    %cst_6 = arith.constant 4.471500e-02 : f32
    %8 = vector.broadcast %cst_6 : f32 to vector<16x512xf32>
    %9 = arith.mulf %8, %5 : vector<16x512xf32>
    %10 = arith.mulf %9, %5 : vector<16x512xf32>
    %11 = arith.mulf %10, %5 : vector<16x512xf32>
    %12 = arith.addf %5, %11 : vector<16x512xf32>
    %cst_7 = arith.constant 0.797884583 : f32
    %13 = vector.broadcast %cst_7 : f32 to vector<16x512xf32>
    %14 = arith.mulf %13, %12 : vector<16x512xf32>
    %15 = math.tanh %14 : vector<16x512xf32>
    %cst_8 = arith.constant 1.000000e+00 : f32
    %16 = vector.broadcast %cst_8 : f32 to vector<16x512xf32>
    %17 = arith.addf %16, %15 : vector<16x512xf32>
    %18 = arith.mulf %7, %17 : vector<16x512xf32>
    %c0_9 = arith.constant 0 : index
    %c0_10 = arith.constant 0 : index
    %19 = vector.load %arg4[%c0_9, %c0_10] : memref<512x128xf32, #tpu.memory_space<vmem>>, vector<512x128xf32>
    %cst_11 = arith.constant dense<0.000000e+00> : vector<16x128xf32>
    %20 = tpu.matmul %18, %19, %cst_11 {dimension_numbers = #tpu.dot_dimension_numbers<[1], [0], [0], [1], [0, 0, 1, 1], [], []>} : vector<16x512xf32>, vector<512x128xf32>, vector<16x128xf32> -> vector<16x128xf32>
    %c0_12 = arith.constant 0 : index
    %c0_13 = arith.constant 0 : index
    %21 = vector.load %arg5[%c0_12, %c0_13] : memref<1x128xf32, #tpu.memory_space<vmem>>, vector<1x128xf32>
    %22 = vector.broadcast %21 : vector<1x128xf32> to vector<16x128xf32>
    %23 = arith.addf %20, %22 : vector<16x128xf32>
    %c0_14 = arith.constant 0 : index
    %c0_15 = arith.constant 0 : index
    %24 = vector.load %arg6[%c0_14, %c0_15] : memref<16x128xf32, #tpu.memory_space<vmem>>, vector<16x128xf32>
    tpu.vector_store %arg6[%c0_14, %c0_15], %23 {strides = array<i32>} : memref<16x128xf32, #tpu.memory_space<vmem>>, vector<16x128xf32>,
    return
  }
  func.func @transform_0(%arg0: i32) -> (i32, i32) {
    %c0_i32 = arith.constant 0 : i32
    %c0_i32_0 = arith.constant 0 : i32
    return %arg0, %c0_i32 : i32, i32
  }
  func.func @transform_1(%arg0: i32) -> (i32, i32) {
    %c0_i32 = arith.constant 0 : i32
    %c0_i32_0 = arith.constant 0 : i32
    %c0_i32_1 = arith.constant 0 : i32
    return %c0_i32, %c0_i32_0 : i32, i32
  }
  func.func @transform_2(%arg0: i32) -> (i32, i32) {
    %c0_i32 = arith.constant 0 : i32
    %c0_i32_0 = arith.constant 0 : i32
    %c0_i32_1 = arith.constant 0 : i32
    return %c0_i32, %c0_i32_0 : i32, i32
  }
  func.func @transform_3(%arg0: i32) -> (i32, i32) {
    %c0_i32 = arith.constant 0 : i32
    %c0_i32_0 = arith.constant 0 : i32
    %c0_i32_1 = arith.constant 0 : i32
    return %c0_i32, %c0_i32_0 : i32, i32
  }
  func.func @transform_4(%arg0: i32) -> (i32, i32) {
    %c0_i32 = arith.constant 0 : i32
    %c0_i32_0 = arith.constant 0 : i32
    %c0_i32_1 = arith.constant 0 : i32
    return %c0_i32, %c0_i32_0 : i32, i32
  }
  func.func @transform_5(%arg0: i32) -> (i32, i32) {
    %c0_i32 = arith.constant 0 : i32
    %c0_i32_0 = arith.constant 0 : i32
    return %arg0, %c0_i32 : i32, i32
  }
}

</mosaic_0001>

<llo_original>
// kernel: mlp_forward.1
$region0: #{mlp_forward.1}
  #allocation0 [shape = 'u32[]', space=smem, size = 0x4, offset = 0x4, fixed_abs, tag = 'smem constant byte address 0x4 - core index']
  #allocation1 [shape = 'u32[144,128]{1,0:T(1,128)}', space=vmem, size = 0x12000, scoped, tag = 'internal scratch']
  %s0 = inlined_call_operand.hbm [shape: f32[16,128], index: 0, kind: input, shape index: {}]
  %s1 = inlined_call_operand.hbm [shape: f32[128,512], index: 1, kind: input, shape index: {}]
  %s2 = inlined_call_operand.vmem [shape: f32[1,512], index: 2, kind: input, shape index: {}]
  %s3 = inlined_call_operand.hbm [shape: f32[512,128], index: 3, kind: input, shape index: {}]
  %s4 = inlined_call_operand.vmem [shape: f32[1,128], index: 4, kind: input, shape index: {}]
  %s5 = inlined_call_operand.hbm [shape: f32[16,128], index: 5, kind: output, shape index: {}]
  %s6 = sld [smem:[#allocation0]]
  $region42: #{mlp_forward.1} parent=0
    _
  %s8 = ssub.s32 1, %s6
  %s9 = scalar_select 0, %s8, %s6
  $region1: #{mlp_forward.1} parent=0
    #allocation2 [shape = 'u8[8192]{0}', space=vmem, size = 0x2000, scoped, tag = 'input window, operand 0, single buffered']
    #allocation3 [shape = 's32[1]{0}', space=sflag, size = 0x4, scoped, tag = 'scoped memory for mlp_forward.1']
    #allocation4 [shape = 's32[1]{0}', space=sflag, size = 0x4, scoped, tag = 'scoped memory for mlp_forward.1']
    #allocation5 [shape = 'u8[262144]{0}', space=vmem, size = 0x40000, scoped, tag = 'input window, operand 1, single buffered']
    #allocation6 [shape = 's32[1]{0}', space=sflag, size = 0x4, scoped, tag = 'scoped memory for mlp_forward.1']
    #allocation7 [shape = 'u8[262144]{0}', space=vmem, size = 0x40000, scoped, tag = 'input window, operand 3, single buffered']
    #allocation8 [shape = 'u8[8192]{0}', space=vmem, size = 0x2000, scoped, tag = 'output window, operand 0, single buffered']
    %10 = vsyncpa [#allocation3], 0
    %11 = vsyncpa [#allocation6], 0
    %12 = vsyncpa [#allocation4], 0
    // Predicated region
    $region2: #{mlp_forward.1} parent=1 // pred_check
      _
    $region3: #{mlp_forward.1} parent=1 // pred_check_branch
      %14 = sbr.rel (0) target = $region5
    $region4: #{mlp_forward.1} parent=1 // pred_region
      %s16 = ssub.s32 256, 256
      %17 = vsyncadd [#allocation3], %s16
      %s18 = sshll.u32 [#allocation2], 4
      %s19 = int_to_ptr.vmem [resolvable:$true] %s18
      %24 = dma.hbm_to_vmem [thread:$0]  %s0, 256, %s19, [#allocation3], 128, 128, 8
    $region5: #{mlp_forward.1} parent=1 // pred_fallthru
      _
    // Predicated region
    $region6: #{mlp_forward.1} parent=1 // pred_check
      _
    $region7: #{mlp_forward.1} parent=1 // pred_check_branch
      %26 = sbr.rel (0) target = $region9
    $region8: #{mlp_forward.1} parent=1 // pred_region
      %s28 = ssub.s32 8192, 8192
      %29 = vsyncadd [#allocation6], %s28
      %s30 = sshll.u32 [#allocation5], 4
      %s31 = int_to_ptr.vmem [resolvable:$true] %s30
      %36 = dma.hbm_to_vmem [thread:$0]  %s1, 8192, %s31, [#allocation6], 512, 512, 32
    $region9: #{mlp_forward.1} parent=1 // pred_fallthru
      _
    // Predicated region
    $region10: #{mlp_forward.1} parent=1 // pred_check
      _
    $region11: #{mlp_forward.1} parent=1 // pred_check_branch
      %38 = sbr.rel (0) target = $region13
    $region12: #{mlp_forward.1} parent=1 // pred_region
      _
    $region13: #{mlp_forward.1} parent=1 // pred_fallthru
      _
    // Predicated region
    $region14: #{mlp_forward.1} parent=1 // pred_check
      _
    $region15: #{mlp_forward.1} parent=1 // pred_check_branch
      %40 = sbr.rel (0) target = $region17
    $region16: #{mlp_forward.1} parent=1 // pred_region
      %s42 = ssub.s32 8192, 8192
      %43 = vsyncadd [#allocation6], %s42
      %s44 = sshll.u32 [#allocation7], 4
      %s45 = int_to_ptr.vmem [resolvable:$true] %s44
      %50 = dma.hbm_to_vmem [thread:$0]  %s3, 8192, %s45, [#allocation6], 128, 128, 8
    $region17: #{mlp_forward.1} parent=1 // pred_fallthru
      _
    // Predicated region
    $region18: #{mlp_forward.1} parent=1 // pred_check
      _
    $region19: #{mlp_forward.1} parent=1 // pred_check_branch
      %52 = sbr.rel (0) target = $region21
    $region20: #{mlp_forward.1} parent=1 // pred_region
      _
    $region21: #{mlp_forward.1} parent=1 // pred_fallthru
      _
    // Predicated region
    $region22: #{mlp_forward.1} parent=1 // pred_check
      _
    $region23: #{mlp_forward.1} parent=1 // pred_check_branch
      %54 = sbr.rel (0) target = $region25
    $region24: #{mlp_forward.1} parent=1 // pred_region
      %55 = dma.done [#allocation3], 256
    $region25: #{mlp_forward.1} parent=1 // pred_fallthru
      _
    // Predicated region
    $region26: #{mlp_forward.1} parent=1 // pred_check
      _
    $region27: #{mlp_forward.1} parent=1 // pred_check_branch
      %57 = sbr.rel (0) target = $region29
    $region28: #{mlp_forward.1} parent=1 // pred_region
      %58 = dma.done [#allocation6], 8192
    $region29: #{mlp_forward.1} parent=1 // pred_fallthru
      _
    // Predicated region
    $region30: #{mlp_forward.1} parent=1 // pred_check
      _
    $region31: #{mlp_forward.1} parent=1 // pred_check_branch
      %60 = sbr.rel (0) target = $region33
    $region32: #{mlp_forward.1} parent=1 // pred_region
      %61 = dma.done [#allocation6], 8192
    $region33: #{mlp_forward.1} parent=1 // pred_fallthru
      _
    %v62 = vld [vmem:[#allocation2] sm:$0xff]
    %v63 = vld [vmem:[#allocation2 + $0x8] sm:$0xff]
    %v64 = vld [vmem:[#allocation5] sm:$0xff]
    %v65 = vld [vmem:[#allocation5 + $0x8] sm:$0xff]
    %v66 = vld [vmem:[#allocation5 + $0x10] sm:$0xff]
    %v67 = vld [vmem:[#allocation5 + $0x18] sm:$0xff]
    %v68 = vld [vmem:[#allocation5 + $0x20] sm:$0xff]
    %v69 = vld [vmem:[#allocation5 + $0x28] sm:$0xff]
    %v70 = vld [vmem:[#allocation5 + $0x30] sm:$0xff]
    %v71 = vld [vmem:[#allocation5 + $0x38] sm:$0xff]
    %v72 = vld [vmem:[#allocation5 + $0x40] sm:$0xff]
    %v73 = vld [vmem:[#allocation5 + $0x48] sm:$0xff]
    %v74 = vld [vmem:[#allocation5 + $0x50] sm:$0xff]
    %v75 = vld [vmem:[#allocation5 + $0x58] sm:$0xff]
    %v76 = vld [vmem:[#allocation5 + $0x60] sm:$0xff]
    %v77 = vld [vmem:[#allocation5 + $0x68] sm:$0xff]
    %v78 = vld [vmem:[#allocation5 + $0x70] sm:$0xff]
    %v79 = vld [vmem:[#allocation5 + $0x78] sm:$0xff]
    %v80 = vld [vmem:[#allocation5 + $0x80] sm:$0xff]
    %v81 = vld [vmem:[#allocation5 + $0x88] sm:$0xff]
    %v82 = vld [vmem:[#allocation5 + $0x90] sm:$0xff]
    %v83 = vld [vmem:[#allocation5 + $0x98] sm:$0xff]
    %v84 = vld [vmem:[#allocation5 + $0xa0] sm:$0xff]
    %v85 = vld [vmem:[#allocation5 + $0xa8] sm:$0xff]
    %v86 = vld [vmem:[#allocation5 + $0xb0] sm:$0xff]
    %v87 = vld [vmem:[#allocation5 + $0xb8] sm:$0xff]
    %v88 = vld [vmem:[#allocation5 + $0xc0] sm:$0xff]
    %v89 = vld [vmem:[#allocation5 + $0xc8] sm:$0xff]
    %v90 = vld [vmem:[#allocation5 + $0xd0] sm:$0xff]
    %v91 = vld [vmem:[#allocation5 + $0xd8] sm:$0xff]
    %v92 = vld [vmem:[#allocation5 + $0xe0] sm:$0xff]
    %v93 = vld [vmem:[#allocation5 + $0xe8] sm:$0xff]
    %v94 = vld [vmem:[#allocation5 + $0xf0] sm:$0xff]
    %v95 = vld [vmem:[#allocation5 + $0xf8] sm:$0xff]
    %v96 = vld [vmem:[#allocation5 + $0x100] sm:$0xff]
    %v97 = vld [vmem:[#allocation5 + $0x108] sm:$0xff]
    %v98 = vld [vmem:[#allocation5 + $0x110] sm:$0xff]
    %v99 = vld [vmem:[#allocation5 + $0x118] sm:$0xff]
    %v100 = vld [vmem:[#allocation5 + $0x120] sm:$0xff]
    %v101 = vld [vmem:[#allocation5 + $0x128] sm:$0xff]
    %v102 = vld [vmem:[#allocation5 + $0x130] sm:$0xff]
    %v103 = vld [vmem:[#allocation5 + $0x138] sm:$0xff]
    %v104 = vld [vmem:[#allocation5 + $0x140] sm:$0xff]
    %v105 = vld [vmem:[#allocation5 + $0x148] sm:$0xff]
    %v106 = vld [vmem:[#allocation5 + $0x150] sm:$0xff]
    %v107 = vld [vmem:[#allocation5 + $0x158] sm:$0xff]
    %v108 = vld [vmem:[#allocation5 + $0x160] sm:$0xff]
    %v109 = vld [vmem:[#allocation5 + $0x168] sm:$0xff]
    %v110 = vld [vmem:[#allocation5 + $0x170] sm:$0xff]
    %v111 = vld [vmem:[#allocation5 + $0x178] sm:$0xff]
    %v112 = vld [vmem:[#allocation5 + $0x180] sm:$0xff]
    %v113 = vld [vmem:[#allocation5 + $0x188] sm:$0xff]
    %v114 = vld [vmem:[#allocation5 + $0x190] sm:$0xff]
    %v115 = vld [vmem:[#allocation5 + $0x198] sm:$0xff]
    %v116 = vld [vmem:[#allocation5 + $0x1a0] sm:$0xff]
    %v117 = vld [vmem:[#allocation5 + $0x1a8] sm:$0xff]
    %v118 = vld [vmem:[#allocation5 + $0x1b0] sm:$0xff]
    %v119 = vld [vmem:[#allocation5 + $0x1b8] sm:$0xff]
    %v120 = vld [vmem:[#allocation5 + $0x1c0] sm:$0xff]
    %v121 = vld [vmem:[#allocation5 + $0x1c8] sm:$0xff]
    %v122 = vld [vmem:[#allocation5 + $0x1d0] sm:$0xff]
    %v123 = vld [vmem:[#allocation5 + $0x1d8] sm:$0xff]
    %v124 = vld [vmem:[#allocation5 + $0x1e0] sm:$0xff]
    %v125 = vld [vmem:[#allocation5 + $0x1e8] sm:$0xff]
    %v126 = vld [vmem:[#allocation5 + $0x1f0] sm:$0xff]
    %v127 = vld [vmem:[#allocation5 + $0x1f8] sm:$0xff]
    %v128 = vld [vmem:[%s2] sm:$0xf]
    %v130 = vlaneseq
    %v131 = vshrl.u32 %v130, 7
    %v132 = vsub.s32 0, %v131
    %v133 = vrot.slane %v128, %v132
    %v134 = vlaneseq
    %v135 = vshrl.u32 %v134, 7
    %v136 = vsub.s32 1, %v135
    %v137 = vrot.slane %v128, %v136
    %v138 = vlaneseq
    %v139 = vshrl.u32 %v138, 7
    %v140 = vsub.s32 2, %v139
    %v141 = vrot.slane %v128, %v140
    %v142 = vlaneseq
    %v143 = vshrl.u32 %v142, 7
    %v144 = vsub.s32 3, %v143
    %v145 = vrot.slane %v128, %v144
    %150 = vmatprep.subr.mxu0 %v125
    %151 = vmatpush1.msra.mxu0 %v124
    %152 = vmatprep.subr.mxu0 %v121
    %153 = vmatpush1.msra.mxu0 %v120
    %154 = vmatprep.subr.mxu0 %v117
    %155 = vmatpush1.msra.mxu0 %v116
    %156 = vmatprep.subr.mxu0 %v113
    %157 = vmatpush1.msra.mxu0 %v112
    %158 = vmatprep.subr.mxu0 %v109
    %159 = vmatpush1.msra.mxu0 %v108
    %160 = vmatprep.subr.mxu0 %v105
    %161 = vmatpush1.msra.mxu0 %v104
    %162 = vmatprep.subr.mxu0 %v101
    %163 = vmatpush1.msra.mxu0 %v100
    %164 = vmatprep.subr.mxu0 %v97
    %165 = vmatpush1.msra.mxu0 %v96
    %166 = vmatprep.subr.mxu0 %v93
    %167 = vmatpush1.msra.mxu0 %v92
    %168 = vmatprep.subr.mxu0 %v89
    %169 = vmatpush1.msra.mxu0 %v88
    %170 = vmatprep.subr.mxu0 %v85
    %171 = vmatpush1.msra.mxu0 %v84
    %172 = vmatprep.subr.mxu0 %v81
    %173 = vmatpush1.msra.mxu0 %v80
    %174 = vmatprep.subr.mxu0 %v77
    %175 = vmatpush1.msra.mxu0 %v76
    %176 = vmatprep.subr.mxu0 %v73
    %177 = vmatpush1.msra.mxu0 %v72
    %178 = vmatprep.subr.mxu0 %v69
    %179 = vmatpush1.msra.mxu0 %v68
    %180 = vmatprep.subr.mxu0 %v65
    %181 = vmatpush1.msra.mxu0 %v64
    %182 = vmatprep.subr.mxu0 0.0
    %183 = vmatpush2.msra.mxu0 0.0
    %184 = vmatprep.subr.mxu0 0.0
    %185 = vmatpush2.msra.mxu0 0.0
    %186 = vmatprep.subr.mxu0 0.0
    %187 = vmatpush2.msra.mxu0 0.0
    %188 = vmatprep.subr.mxu0 0.0
    %189 = vmatpush2.msra.mxu0 0.0
    %190 = vmatprep.subr.mxu0 0.0
    %191 = vmatpush2.msra.mxu0 0.0
    %192 = vmatprep.subr.mxu0 0.0
    %193 = vmatpush2.msra.mxu0 0.0
    %194 = vmatprep.subr.mxu0 0.0
    %195 = vmatpush2.msra.mxu0 0.0
    %196 = vmatprep.subr.mxu0 0.0
    %197 = vmatpush2.msra.mxu0 0.0
    %198 = vmatprep.subr.mxu0 0.0
    %199 = vmatpush2.msra.mxu0 0.0
    %200 = vmatprep.subr.mxu0 0.0
    %201 = vmatpush2.msra.mxu0 0.0
    %202 = vmatprep.subr.mxu0 0.0
    %203 = vmatpush2.msra.mxu0 0.0
    %204 = vmatprep.subr.mxu0 0.0
    %205 = vmatpush2.msra.mxu0 0.0
    %206 = vmatprep.subr.mxu0 0.0
    %207 = vmatpush2.msra.mxu0 0.0
    %208 = vmatprep.subr.mxu0 0.0
    %209 = vmatpush2.msra.mxu0 0.0
    %210 = vmatprep.subr.mxu0 0.0
    %211 = vmatpush2.msra.mxu0 0.0
    %212 = vmatprep.subr.mxu0 0.0
    %213 = vmatpush2.msra.mxu0 0.0
    %214 = vmatprep.mubr.f32.mxu0 0.0
    %215 = vmatmul.mubr.f32.gmra.mxu0 %v62
    %v216 = vpop.f32.mrf.mxu0
    %v217 = vadd.f32 %v133, %v216
    %v218 = vpop.f32.mrf.mxu0
    %v219 = vadd.f32 %v137, %v218
    %220 = vmatprep.mubr.f32.mxu0 0.0
    %221 = vmatmul.mubr.f32.gmra.mxu0 %v63
    %v222 = vpop.f32.mrf.mxu0
    %v223 = vadd.f32 %v133, %v222
    %v224 = vpop.f32.mrf.mxu0
    %v225 = vadd.f32 %v137, %v224
    %226 = vdwg.mxu0
    %227 = vmatprep.subr.mxu0 %v127
    %228 = vmatpush1.msra.mxu0 %v126
    %229 = vmatprep.subr.mxu0 %v123
    %230 = vmatpush1.msra.mxu0 %v122
    %231 = vmatprep.subr.mxu0 %v119
    %232 = vmatpush1.msra.mxu0 %v118
    %233 = vmatprep.subr.mxu0 %v115
    %234 = vmatpush1.msra.mxu0 %v114
    %235 = vmatprep.subr.mxu0 %v111
    %236 = vmatpush1.msra.mxu0 %v110
    %237 = vmatprep.subr.mxu0 %v107
    %238 = vmatpush1.msra.mxu0 %v106
    %239 = vmatprep.subr.mxu0 %v103
    %240 = vmatpush1.msra.mxu0 %v102
    %241 = vmatprep.subr.mxu0 %v99
    %242 = vmatpush1.msra.mxu0 %v98
    %243 = vmatprep.subr.mxu0 %v95
    %244 = vmatpush1.msra.mxu0 %v94
    %245 = vmatprep.subr.mxu0 %v91
    %246 = vmatpush1.msra.mxu0 %v90
    %247 = vmatprep.subr.mxu0 %v87
    %248 = vmatpush1.msra.mxu0 %v86
    %249 = vmatprep.subr.mxu0 %v83
    %250 = vmatpush1.msra.mxu0 %v82
    %251 = vmatprep.subr.mxu0 %v79
    %252 = vmatpush1.msra.mxu0 %v78
    %253 = vmatprep.subr.mxu0 %v75
    %254 = vmatpush1.msra.mxu0 %v74
    %255 = vmatprep.subr.mxu0 %v71
    %256 = vmatpush1.msra.mxu0 %v70
    %257 = vmatprep.subr.mxu0 %v67
    %258 = vmatpush1.msra.mxu0 %v66
    %259 = vmatprep.subr.mxu0 0.0
    %260 = vmatpush2.msra.mxu0 0.0
    %261 = vmatprep.subr.mxu0 0.0
    %262 = vmatpush2.msra.mxu0 0.0
    %263 = vmatprep.subr.mxu0 0.0
    %264 = vmatpush2.msra.mxu0 0.0
    %265 = vmatprep.subr.mxu0 0.0
    %266 = vmatpush2.msra.mxu0 0.0
    %267 = vmatprep.subr.mxu0 0.0
    %268 = vmatpush2.msra.mxu0 0.0
    %269 = vmatprep.subr.mxu0 0.0
    %270 = vmatpush2.msra.mxu0 0.0
    %271 = vmatprep.subr.mxu0 0.0
    %272 = vmatpush2.msra.mxu0 0.0
    %273 = vmatprep.subr.mxu0 0.0
    %274 = vmatpush2.msra.mxu0 0.0
    %275 = vmatprep.subr.mxu0 0.0
    %276 = vmatpush2.msra.mxu0 0.0
    %277 = vmatprep.subr.mxu0 0.0
    %278 = vmatpush2.msra.mxu0 0.0
    %279 = vmatprep.subr.mxu0 0.0
    %280 = vmatpush2.msra.mxu0 0.0
    %281 = vmatprep.subr.mxu0 0.0
    %282 = vmatpush2.msra.mxu0 0.0
    %283 = vmatprep.subr.mxu0 0.0
    %284 = vmatpush2.msra.mxu0 0.0
    %285 = vmatprep.subr.mxu0 0.0
    %286 = vmatpush2.msra.mxu0 0.0
    %287 = vmatprep.subr.mxu0 0.0
    %288 = vmatpush2.msra.mxu0 0.0
    %289 = vmatprep.subr.mxu0 0.0
    %290 = vmatpush2.msra.mxu0 0.0
    %291 = vmatprep.mubr.f32.mxu0 0.0
    %292 = vmatmul.mubr.f32.gmra.mxu0 %v62
    %v293 = vpop.f32.mrf.mxu0
    %v294 = vadd.f32 %v141, %v293
    %v295 = vpop.f32.mrf.mxu0
    %v296 = vadd.f32 %v145, %v295
    %297 = vmatprep.mubr.f32.mxu0 0.0
    %298 = vmatmul.mubr.f32.gmra.mxu0 %v63
    %v299 = vpop.f32.mrf.mxu0
    %v300 = vadd.f32 %v141, %v299
    %v301 = vpop.f32.mrf.mxu0
    %v302 = vadd.f32 %v145, %v301
    %303 = vdwg.mxu0
    %v304 = vmul.f32 %v217, 0.5
    %v305 = vmul.f32 %v219, 0.5
    %v306 = vmul.f32 %v294, 0.5
    %v307 = vmul.f32 %v296, 0.5
    %v308 = vmul.f32 %v223, 0.5
    %v309 = vmul.f32 %v225, 0.5
    %v310 = vmul.f32 %v300, 0.5
    %v311 = vmul.f32 %v302, 0.5
    %v312 = vmul.f32 %v217, 0.044715
    %v313 = vmul.f32 %v219, 0.044715
    %v314 = vmul.f32 %v294, 0.044715
    %v315 = vmul.f32 %v296, 0.044715
    %v316 = vmul.f32 %v223, 0.044715
    %v317 = vmul.f32 %v225, 0.044715
    %v318 = vmul.f32 %v300, 0.044715
    %v319 = vmul.f32 %v302, 0.044715
    %v320 = vmul.f32 %v312, %v217
    %v321 = vmul.f32 %v313, %v219
    %v322 = vmul.f32 %v314, %v294
    %v323 = vmul.f32 %v315, %v296
    %v324 = vmul.f32 %v316, %v223
    %v325 = vmul.f32 %v317, %v225
    %v326 = vmul.f32 %v318, %v300
    %v327 = vmul.f32 %v319, %v302
    %v328 = vmul.f32 %v320, %v217
    %v329 = vmul.f32 %v321, %v219
    %v330 = vmul.f32 %v322, %v294
    %v331 = vmul.f32 %v323, %v296
    %v332 = vmul.f32 %v324, %v223
    %v333 = vmul.f32 %v325, %v225
    %v334 = vmul.f32 %v326, %v300
    %v335 = vmul.f32 %v327, %v302
    %v336 = vadd.f32 %v217, %v328
    %v337 = vadd.f32 %v219, %v329
    %v338 = vadd.f32 %v294, %v330
    %v339 = vadd.f32 %v296, %v331
    %v340 = vadd.f32 %v223, %v332
    %v341 = vadd.f32 %v225, %v333
    %v342 = vadd.f32 %v300, %v334
    %v343 = vadd.f32 %v302, %v335
    %v344 = vmul.f32 %v336, 0.7978846
    %v345 = vmul.f32 %v337, 0.7978846
    %v346 = vmul.f32 %v338, 0.7978846
    %v347 = vmul.f32 %v339, 0.7978846
    %v348 = vmul.f32 %v340, 0.7978846
    %v349 = vmul.f32 %v341, 0.7978846
    %v350 = vmul.f32 %v342, 0.7978846
    %v351 = vmul.f32 %v343, 0.7978846
    %v352 = vtanh.pop %v344
    %v353 = vtanh.pop %v345
    %v354 = vtanh.pop %v346
    %v355 = vtanh.pop %v347
    %v356 = vtanh.pop %v348
    %v357 = vtanh.pop %v349
    %v358 = vtanh.pop %v350
    %v359 = vtanh.pop %v351
    %v360 = vadd.f32 %v352, 1.0
    %v361 = vadd.f32 %v353, 1.0
    %v362 = vadd.f32 %v354, 1.0
    %v363 = vadd.f32 %v355, 1.0
    %v364 = vadd.f32 %v356, 1.0
    %v365 = vadd.f32 %v357, 1.0
    %v366 = vadd.f32 %v358, 1.0
    %v367 = vadd.f32 %v359, 1.0
    %v368 = vmul.f32 %v304, %v360
    %v369 = vmul.f32 %v305, %v361
    %v370 = vmul.f32 %v306, %v362
    %v371 = vmul.f32 %v307, %v363
    %v372 = vmul.f32 %v308, %v364
    %v373 = vmul.f32 %v309, %v365
    %v374 = vmul.f32 %v310, %v366
    %v375 = vmul.f32 %v311, %v367
    %v376 = vld [vmem:[#allocation7] sm:$0xff]
    %v377 = vld [vmem:[#allocation7 + $0x8] sm:$0xff]
    %v378 = vld [vmem:[#allocation7 + $0x10] sm:$0xff]
    %v379 = vld [vmem:[#allocation7 + $0x18] sm:$0xff]
    %v380 = vld [vmem:[#allocation7 + $0x20] sm:$0xff]
    %v381 = vld [vmem:[#allocation7 + $0x28] sm:$0xff]
    %v382 = vld [vmem:[#allocation7 + $0x30] sm:$0xff]
    %v383 = vld [vmem:[#allocation7 + $0x38] sm:$0xff]
    %v384 = vld [vmem:[#allocation7 + $0x40] sm:$0xff]
    %v385 = vld [vmem:[#allocation7 + $0x48] sm:$0xff]
    %v386 = vld [vmem:[#allocation7 + $0x50] sm:$0xff]
    %v387 = vld [vmem:[#allocation7 + $0x58] sm:$0xff]
    %v388 = vld [vmem:[#allocation7 + $0x60] sm:$0xff]
    %v389 = vld [vmem:[#allocation7 + $0x68] sm:$0xff]
    %v390 = vld [vmem:[#allocation7 + $0x70] sm:$0xff]
    %v391 = vld [vmem:[#allocation7 + $0x78] sm:$0xff]
    %v392 = vld [vmem:[#allocation7 + $0x80] sm:$0xff]
    %v393 = vld [vmem:[#allocation7 + $0x88] sm:$0xff]
    %v394 = vld [vmem:[#allocation7 + $0x90] sm:$0xff]
    %v395 = vld [vmem:[#allocation7 + $0x98] sm:$0xff]
    %v396 = vld [vmem:[#allocation7 + $0xa0] sm:$0xff]
    %v397 = vld [vmem:[#allocation7 + $0xa8] sm:$0xff]
    %v398 = vld [vmem:[#allocation7 + $0xb0] sm:$0xff]
    %v399 = vld [vmem:[#allocation7 + $0xb8] sm:$0xff]
    %v400 = vld [vmem:[#allocation7 + $0xc0] sm:$0xff]
    %v401 = vld [vmem:[#allocation7 + $0xc8] sm:$0xff]
    %v402 = vld [vmem:[#allocation7 + $0xd0] sm:$0xff]
    %v403 = vld [vmem:[#allocation7 + $0xd8] sm:$0xff]
    %v404 = vld [vmem:[#allocation7 + $0xe0] sm:$0xff]
    %v405 = vld [vmem:[#allocation7 + $0xe8] sm:$0xff]
    %v406 = vld [vmem:[#allocation7 + $0xf0] sm:$0xff]
    %v407 = vld [vmem:[#allocation7 + $0xf8] sm:$0xff]
    %v408 = vld [vmem:[#allocation7 + $0x100] sm:$0xff]
    %v409 = vld [vmem:[#allocation7 + $0x108] sm:$0xff]
    %v410 = vld [vmem:[#allocation7 + $0x110] sm:$0xff]
    %v411 = vld [vmem:[#allocation7 + $0x118] sm:$0xff]
    %v412 = vld [vmem:[#allocation7 + $0x120] sm:$0xff]
    %v413 = vld [vmem:[#allocation7 + $0x128] sm:$0xff]
    %v414 = vld [vmem:[#allocation7 + $0x130] sm:$0xff]
    %v415 = vld [vmem:[#allocation7 + $0x138] sm:$0xff]
    %v416 = vld [vmem:[#allocation7 + $0x140] sm:$0xff]
    %v417 = vld [vmem:[#allocation7 + $0x148] sm:$0xff]
    %v418 = vld [vmem:[#allocation7 + $0x150] sm:$0xff]
    %v419 = vld [vmem:[#allocation7 + $0x158] sm:$0xff]
    %v420 = vld [vmem:[#allocation7 + $0x160] sm:$0xff]
    %v421 = vld [vmem:[#allocation7 + $0x168] sm:$0xff]
    %v422 = vld [vmem:[#allocation7 + $0x170] sm:$0xff]
    %v423 = vld [vmem:[#allocation7 + $0x178] sm:$0xff]
    %v424 = vld [vmem:[#allocation7 + $0x180] sm:$0xff]
    %v425 = vld [vmem:[#allocation7 + $0x188] sm:$0xff]
    %v426 = vld [vmem:[#allocation7 + $0x190] sm:$0xff]
    %v427 = vld [vmem:[#allocation7 + $0x198] sm:$0xff]
    %v428 = vld [vmem:[#allocation7 + $0x1a0] sm:$0xff]
    %v429 = vld [vmem:[#allocation7 + $0x1a8] sm:$0xff]
    %v430 = vld [vmem:[#allocation7 + $0x1b0] sm:$0xff]
    %v431 = vld [vmem:[#allocation7 + $0x1b8] sm:$0xff]
    %v432 = vld [vmem:[#allocation7 + $0x1c0] sm:$0xff]
    %v433 = vld [vmem:[#allocation7 + $0x1c8] sm:$0xff]
    %v434 = vld [vmem:[#allocation7 + $0x1d0] sm:$0xff]
    %v435 = vld [vmem:[#allocation7 + $0x1d8] sm:$0xff]
    %v436 = vld [vmem:[#allocation7 + $0x1e0] sm:$0xff]
    %v437 = vld [vmem:[#allocation7 + $0x1e8] sm:$0xff]
    %v438 = vld [vmem:[#allocation7 + $0x1f0] sm:$0xff]
    %v439 = vld [vmem:[#allocation7 + $0x1f8] sm:$0xff]
    %v440 = vld [vmem:[%s4] sm:$0x1]
    %v442 = vlaneseq
    %v443 = vshrl.u32 %v442, 7
    %v444 = vsub.s32 0, %v443
    %v445 = vrot.slane %v440, %v444
    %447 = vmatprep.subr.mxu0 0.0
    %448 = vmatpush1.msra.mxu0 %v391
    %449 = vmatprep.subr.mxu0 0.0
    %450 = vmatpush1.msra.mxu0 %v390
    %451 = vmatprep.subr.mxu0 0.0
    %452 = vmatpush1.msra.mxu0 %v389
    %453 = vmatprep.subr.mxu0 0.0
    %454 = vmatpush1.msra.mxu0 %v388
    %455 = vmatprep.subr.mxu0 0.0
    %456 = vmatpush1.msra.mxu0 %v387
    %457 = vmatprep.subr.mxu0 0.0
    %458 = vmatpush1.msra.mxu0 %v386
    %459 = vmatprep.subr.mxu0 0.0
    %460 = vmatpush1.msra.mxu0 %v385
    %461 = vmatprep.subr.mxu0 0.0
    %462 = vmatpush1.msra.mxu0 %v384
    %463 = vmatprep.subr.mxu0 0.0
    %464 = vmatpush1.msra.mxu0 %v383
    %465 = vmatprep.subr.mxu0 0.0
    %466 = vmatpush1.msra.mxu0 %v382
    %467 = vmatprep.subr.mxu0 0.0
    %468 = vmatpush1.msra.mxu0 %v381
    %469 = vmatprep.subr.mxu0 0.0
    %470 = vmatpush1.msra.mxu0 %v380
    %471 = vmatprep.subr.mxu0 0.0
    %472 = vmatpush1.msra.mxu0 %v379
    %473 = vmatprep.subr.mxu0 0.0
    %474 = vmatpush1.msra.mxu0 %v378
    %475 = vmatprep.subr.mxu0 0.0
    %476 = vmatpush1.msra.mxu0 %v377
    %477 = vmatprep.subr.mxu0 0.0
    %478 = vmatpush1.msra.mxu0 %v376
    %479 = vmatprep.subr.mxu0 0.0
    %480 = vmatpush2.msra.mxu0 %v407
    %481 = vmatprep.subr.mxu0 0.0
    %482 = vmatpush2.msra.mxu0 %v406
    %483 = vmatprep.subr.mxu0 0.0
    %484 = vmatpush2.msra.mxu0 %v405
    %485 = vmatprep.subr.mxu0 0.0
    %486 = vmatpush2.msra.mxu0 %v404
    %487 = vmatprep.subr.mxu0 0.0
    %488 = vmatpush2.msra.mxu0 %v403
    %489 = vmatprep.subr.mxu0 0.0
    %490 = vmatpush2.msra.mxu0 %v402
    %491 = vmatprep.subr.mxu0 0.0
    %492 = vmatpush2.msra.mxu0 %v401
    %493 = vmatprep.subr.mxu0 0.0
    %494 = vmatpush2.msra.mxu0 %v400
    %495 = vmatprep.subr.mxu0 0.0
    %496 = vmatpush2.msra.mxu0 %v399
    %497 = vmatprep.subr.mxu0 0.0
    %498 = vmatpush2.msra.mxu0 %v398
    %499 = vmatprep.subr.mxu0 0.0
    %500 = vmatpush2.msra.mxu0 %v397
    %501 = vmatprep.subr.mxu0 0.0
    %502 = vmatpush2.msra.mxu0 %v396
    %503 = vmatprep.subr.mxu0 0.0
    %504 = vmatpush2.msra.mxu0 %v395
    %505 = vmatprep.subr.mxu0 0.0
    %506 = vmatpush2.msra.mxu0 %v394
    %507 = vmatprep.subr.mxu0 0.0
    %508 = vmatpush2.msra.mxu0 %v393
    %509 = vmatprep.subr.mxu0 0.0
    %510 = vmatpush2.msra.mxu0 %v392
    %511 = vmatprep.mubr.f32.mxu0 %v369
    %512 = vmatmul.mubr.f32.gmra.mxu0 %v368
    %v513 = vpop.f32.mrf.mxu0
    %v514 = vadd.f32 %v445, %v513
    %v515 = vpop.f32.mrf.mxu0
    %516 = vmatprep.mubr.f32.mxu0 %v373
    %517 = vmatmul.mubr.f32.gmra.mxu0 %v372
    %v518 = vpop.f32.mrf.mxu0
    %v519 = vadd.f32 %v445, %v518
    %v520 = vpop.f32.mrf.mxu0
    %521 = vdwg.mxu0
    %522 = vmatprep.subr.mxu0 0.0
    %523 = vmatpush1.msra.mxu0 %v423
    %524 = vmatprep.subr.mxu0 0.0
    %525 = vmatpush1.msra.mxu0 %v422
    %526 = vmatprep.subr.mxu0 0.0
    %527 = vmatpush1.msra.mxu0 %v421
    %528 = vmatprep.subr.mxu0 0.0
    %529 = vmatpush1.msra.mxu0 %v420
    %530 = vmatprep.subr.mxu0 0.0
    %531 = vmatpush1.msra.mxu0 %v419
    %532 = vmatprep.subr.mxu0 0.0
    %533 = vmatpush1.msra.mxu0 %v418
    %534 = vmatprep.subr.mxu0 0.0
    %535 = vmatpush1.msra.mxu0 %v417
    %536 = vmatprep.subr.mxu0 0.0
    %537 = vmatpush1.msra.mxu0 %v416
    %538 = vmatprep.subr.mxu0 0.0
    %539 = vmatpush1.msra.mxu0 %v415
    %540 = vmatprep.subr.mxu0 0.0
    %541 = vmatpush1.msra.mxu0 %v414
    %542 = vmatprep.subr.mxu0 0.0
    %543 = vmatpush1.msra.mxu0 %v413
    %544 = vmatprep.subr.mxu0 0.0
    %545 = vmatpush1.msra.mxu0 %v412
    %546 = vmatprep.subr.mxu0 0.0
    %547 = vmatpush1.msra.mxu0 %v411
    %548 = vmatprep.subr.mxu0 0.0
    %549 = vmatpush1.msra.mxu0 %v410
    %550 = vmatprep.subr.mxu0 0.0
    %551 = vmatpush1.msra.mxu0 %v409
    %552 = vmatprep.subr.mxu0 0.0
    %553 = vmatpush1.msra.mxu0 %v408
    %554 = vmatprep.subr.mxu0 0.0
    %555 = vmatpush2.msra.mxu0 %v439
    %556 = vmatprep.subr.mxu0 0.0
    %557 = vmatpush2.msra.mxu0 %v438
    %558 = vmatprep.subr.mxu0 0.0
    %559 = vmatpush2.msra.mxu0 %v437
    %560 = vmatprep.subr.mxu0 0.0
    %561 = vmatpush2.msra.mxu0 %v436
    %562 = vmatprep.subr.mxu0 0.0
    %563 = vmatpush2.msra.mxu0 %v435
    %564 = vmatprep.subr.mxu0 0.0
    %565 = vmatpush2.msra.mxu0 %v434
    %566 = vmatprep.subr.mxu0 0.0
    %567 = vmatpush2.msra.mxu0 %v433
    %568 = vmatprep.subr.mxu0 0.0
    %569 = vmatpush2.msra.mxu0 %v432
    %570 = vmatprep.subr.mxu0 0.0
    %571 = vmatpush2.msra.mxu0 %v431
    %572 = vmatprep.subr.mxu0 0.0
    %573 = vmatpush2.msra.mxu0 %v430
    %574 = vmatprep.subr.mxu0 0.0
    %575 = vmatpush2.msra.mxu0 %v429
    %576 = vmatprep.subr.mxu0 0.0
    %577 = vmatpush2.msra.mxu0 %v428
    %578 = vmatprep.subr.mxu0 0.0
    %579 = vmatpush2.msra.mxu0 %v427
    %580 = vmatprep.subr.mxu0 0.0
    %581 = vmatpush2.msra.mxu0 %v426
    %582 = vmatprep.subr.mxu0 0.0
    %583 = vmatpush2.msra.mxu0 %v425
    %584 = vmatprep.subr.mxu0 0.0
    %585 = vmatpush2.msra.mxu0 %v424
    %586 = vmatprep.mubr.f32.mxu0 %v371
    %587 = vmatmul.mubr.f32.gmra.mxu0 %v370
    %v588 = vpop.f32.mrf.mxu0
    %v589 = vadd.f32 %v514, %v588
    %v590 = vpop.f32.mrf.mxu0
    %591 = vmatprep.mubr.f32.mxu0 %v375
    %592 = vmatmul.mubr.f32.gmra.mxu0 %v374
    %v593 = vpop.f32.mrf.mxu0
    %v594 = vadd.f32 %v519, %v593
    %v595 = vpop.f32.mrf.mxu0
    %596 = vdwg.mxu0
    %597 = vst [vmem:[#allocation8] sm:$0xff] %v589
    %598 = vst [vmem:[#allocation8 + $0x8] sm:$0xff] %v594
    // Predicated region
    $region34: #{mlp_forward.1} parent=1 // pred_check
      _
    $region35: #{mlp_forward.1} parent=1 // pred_check_branch
      %600 = sbr.rel (0) target = $region37
    $region36: #{mlp_forward.1} parent=1 // pred_region
      %s602 = ssub.s32 256, 256
      %603 = vsyncadd [#allocation4], %s602
      %s604 = sshll.u32 [#allocation8], 4
      %s605 = int_to_ptr.vmem [resolvable:$true] %s604
      %610 = dma.vmem_to_hbm [thread:$0]  %s605, 256, %s5, [#allocation4], 128, 128, 8
    $region37: #{mlp_forward.1} parent=1 // pred_fallthru
      _
    // Predicated region
    $region38: #{mlp_forward.1} parent=1 // pred_check
      _
    $region39: #{mlp_forward.1} parent=1 // pred_check_branch
      %612 = sbr.rel (0) target = $region41
    $region40: #{mlp_forward.1} parent=1 // pred_region
      %613 = dma.done [#allocation4], 256
    $region41: #{mlp_forward.1} parent=1 // pred_fallthru
      _
    %614 = vsyncpa [#allocation3], 1
    %615 = vsyncpa [#allocation6], 1
    %616 = vsyncpa [#allocation4], 1

</llo_original>
